<compile_context>
chip_gen: v6e
topology: v6e:2x2x1
jax: 0.10.0
libtpu: 0.0.40
codegen_flags: <defaults>
</compile_context>

<pallas_src>
import jax
import jax.numpy as jnp
from jax.experimental import pallas as pl
from jax.experimental.pallas import tpu as pltpu

# Explicit scoped-VMEM budget: above the 16/32 MiB defaults (v5e / v6e+) while
# staying comfortably inside v7x's 64 MiB physical VMEM per TensorCore.
_VMEM_LIMIT = 48 * 1024 * 1024


def _largest_tile(n, cap):
    """Largest divisor of n that is a multiple of 8 and <= cap.

    Falls back to the full dimension (always a legal block shape), so an
    illegal / non-dividing tile is never produced.
    """
    cap = min(cap, n)
    for t in range(cap, 7, -1):
        if n % t == 0 and t % 8 == 0:
            return t
    return n


# ----------------------------------------------------------------------------
# Kernel 1: kNN scores.  scores[i, j] = 2<x_i, x_j> - ||x_j||^2.
# Natural (tile_n, C+1) @ (C+1, N) MXU contraction; cols block lane-dense in N.
# ----------------------------------------------------------------------------
def _knn_scores_kernel(rows_ref, colsT_ref, out_ref):
    out_ref[...] = jnp.dot(rows_ref[...], colsT_ref[...],
                           preferred_element_type=jnp.float32)


def _knn_indices(x_t, k):
    B, N, C = x_t.shape
    sq = jnp.sum(x_t * x_t, axis=-1, keepdims=True)                    # (B,N,1)
    rows_aug = jnp.concatenate(
        [2.0 * x_t, jnp.ones((B, N, 1), jnp.float32)], axis=-1)        # (B,N,C+1)
    # Pre-transposed cols: lane-dense along N, natural (M,K)x(K,N) MXU form.
    colsT_aug = jnp.concatenate([x_t, -sq], axis=-1).transpose(0, 2, 1)  # (B,C+1,N)

    tile_n = _largest_tile(N, cap=512)
    scores = pl.pallas_call(
        _knn_scores_kernel,
        out_shape=jax.ShapeDtypeStruct((B, N, N), jnp.float32),
        grid=(B, N // tile_n),
        in_specs=[
            pl.BlockSpec((pl.Squeezed(), tile_n, C + 1), lambda b, i: (b, i, 0)),
            pl.BlockSpec((pl.Squeezed(), C + 1, N), lambda b, i: (b, 0, 0)),
        ],
        out_specs=pl.BlockSpec((pl.Squeezed(), tile_n, N), lambda b, i: (b, i, 0)),
        compiler_params=pltpu.CompilerParams(
            dimension_semantics=("parallel", "parallel"),
            vmem_limit_bytes=_VMEM_LIMIT),
    )(rows_aug, colsT_aug)
    # TODO(synk): a streaming in-kernel top-k (never materializing the (B,N,N)
    # score matrix) has no clean Pallas equivalent here; selection stays in XLA.
    _, idx = jax.lax.top_k(scores, k)                                  # (B, N, k)
    return idx


# ----------------------------------------------------------------------------
# Kernel 2: the 1x1 conv applied once per point.
#   P = x @ W1 (neighbor term), Q = x @ (W2 - W1) (center term),
# emitted as two separate outputs (no strided post-slices).
# ----------------------------------------------------------------------------
def _pq_kernel(x_ref, w_ref, p_ref, q_ref):
    x = x_ref[...]
    o = p_ref.shape[-1]
    p_ref[...] = jnp.dot(x, w_ref[:, :o], preferred_element_type=jnp.float32)
    q_ref[...] = jnp.dot(x, w_ref[:, o:], preferred_element_type=jnp.float32)


# ----------------------------------------------------------------------------
# Kernel 3: single pass over the gathered neighbor terms, k folded into one
# grid step.  y = G[kk] + Q  ->  max_k(y), min_k(y), centered sum / sum-sq.
# Accumulators live in vregs across the unrolled k loop; each output is
# stored exactly once per row tile.
# ----------------------------------------------------------------------------
def _edge_reduce_kernel(g_ref, q_ref, c_ref,
                        max_ref, min_ref, sum_ref, sumsq_ref):
    k = g_ref.shape[0]
    q = q_ref[...]                                   # (tile, Of)
    c = c_ref[...]                                   # (1, Of)

    y0 = g_ref[0] + q
    yc0 = y0 - c
    init = (y0, y0,
            jnp.sum(yc0, axis=0, keepdims=True),
            jnp.sum(yc0 * yc0, axis=0, keepdims=True))

    def body(kk, carry):
        y_max, y_min, s1, s2 = carry
        y = g_ref[kk] + q
        yc = y - c
        return (jnp.maximum(y_max, y),
                jnp.minimum(y_min, y),
                s1 + jnp.sum(yc, axis=0, keepdims=True),
                s2 + jnp.sum(yc * yc, axis=0, keepdims=True))

    y_max, y_min, s1, s2 = jax.lax.fori_loop(1, k, body, init, unroll=True)

    max_ref[...] = y_max
    min_ref[...] = y_min
    sum_ref[...] = s1
    sumsq_ref[...] = s2


# ----------------------------------------------------------------------------
# Wrapper (glue: kNN top_k, neighbor gather, parameter folding, finalize).
# ----------------------------------------------------------------------------
def edge_convolution(x, conv_weight, bn_gamma, bn_beta, *, k,
                     eps=1e-5, negative_slope=0.2):
    B, C, N = x.shape
    O = conv_weight.shape[0]
    M = B * N

    x_t = jnp.transpose(x, (0, 2, 1)).astype(jnp.float32)        # (B, N, C)

    # kNN graph (pairwise scores in Pallas, top_k selection in JAX glue).
    idx = _knn_indices(x_t, k)                                   # (B, N, k)

    # Conv decomposition weights.
    W = conv_weight.reshape(O, 2 * C).astype(jnp.float32)
    W1 = W[:, :C].T                                              # (C, O)
    W2 = W[:, C:].T                                              # (C, O)
    Wcat = jnp.concatenate([W1, W2 - W1], axis=1)                # (C, 2O)

    x_flat = x_t.reshape(M, C)
    tile_pq = _largest_tile(M, cap=4096)
    P, Q = pl.pallas_call(
        _pq_kernel,
        out_shape=(jax.ShapeDtypeStruct((M, O), jnp.float32),
                   jax.ShapeDtypeStruct((M, O), jnp.float32)),
        grid=(M // tile_pq,),
        in_specs=[pl.BlockSpec((tile_pq, C), lambda i: (i, 0)),
                  pl.BlockSpec((C, 2 * O), lambda i: (0, 0))],
        out_specs=(pl.BlockSpec((tile_pq, O), lambda i: (i, 0)),
                   pl.BlockSpec((tile_pq, O), lambda i: (i, 0))),
        compiler_params=pltpu.CompilerParams(
            dimension_semantics=("parallel",),
            vmem_limit_bytes=_VMEM_LIMIT),
    )(x_flat, Wcat)

    # Lane-dense folding: pack f consecutive points into one row of f*O lanes
    # so every reduce-kernel load/store fills the 128-lane width.
    f = 128 // O if (O < 128 and 128 % O == 0) else 1
    while f > 1 and M % f != 0:
        f //= 2
    Of = f * O
    Mf = M // f

    # Neighbor-term gather.
    # TODO(synk): a vectorized dynamic row-gather has no clean/portable Pallas
    # TPU equivalent; done with an XLA gather in glue.  The contiguous
    # (k, Mf, Of) layout keeps the reduce kernel's block DMAs fully dense.
    offs = (jnp.arange(B, dtype=idx.dtype) * N)[:, None, None]
    idx_all = (idx + offs).reshape(M, k).T                       # (k, M)
    G = jnp.take(P, idx_all, axis=0).reshape(k, Mf, Of)          # (k, Mf, Of)
    Qf = Q.reshape(Mf, Of)

    # Per-channel centering constant for numerically stable BN statistics.
    c0 = (jnp.mean(P, axis=0, keepdims=True)
          + jnp.mean(Q, axis=0, keepdims=True))                  # (1, O)
    c0f = jnp.tile(c0, (1, f))                                   # (1, Of)

    # Row tile sized so the (k, tile_mf, Of) neighbor block (double-buffered)
    # stays well inside the VMEM budget on every TPU generation.
    cap_rows = max(8, (8 * 1024 * 1024) // (k * Of * 4))
    tile_mf = _largest_tile(Mf, cap=min(2048, cap_rows))
    n_m = Mf // tile_mf

    y_max_f, y_min_f, psum, psumsq = pl.pallas_call(
        _edge_reduce_kernel,
        out_shape=(
            jax.ShapeDtypeStruct((Mf, Of), jnp.float32),          # max_k y
            jax.ShapeDtypeStruct((Mf, Of), jnp.float32),          # min_k y
            jax.ShapeDtypeStruct((n_m, 1, Of), jnp.float32),      # sum(y - c0)
            jax.ShapeDtypeStruct((n_m, 1, Of), jnp.float32),      # sum((y-c0)^2)
        ),
        grid=(n_m,),
        in_specs=[
            pl.BlockSpec((k, tile_mf, Of), lambda i: (0, i, 0)),
            pl.BlockSpec((tile_mf, Of), lambda i: (i, 0)),
            pl.BlockSpec((1, Of), lambda i: (0, 0)),
        ],
        out_specs=(
            pl.BlockSpec((tile_mf, Of), lambda i: (i, 0)),
            pl.BlockSpec((tile_mf, Of), lambda i: (i, 0)),
            pl.BlockSpec((pl.Squeezed(), 1, Of), lambda i: (i, 0, 0)),
            pl.BlockSpec((pl.Squeezed(), 1, Of), lambda i: (i, 0, 0)),
        ),
        compiler_params=pltpu.CompilerParams(
            dimension_semantics=("parallel",),
            vmem_limit_bytes=_VMEM_LIMIT),
    )(G, Qf, c0f)

    # Training-mode BatchNorm statistics (biased variance), folded affine.
    count = jnp.float32(M * k)
    s1 = jnp.sum(psum.reshape(n_m, f, O), axis=(0, 1)) / count   # E[y - c0]
    s2 = jnp.sum(psumsq.reshape(n_m, f, O), axis=(0, 1)) / count # E[(y - c0)^2]
    mean = s1 + c0[0]
    var = jnp.maximum(s2 - s1 * s1, 0.0)                         # shift-invariant
    scale = bn_gamma.astype(jnp.float32) / jnp.sqrt(var + eps)
    shift = bn_beta.astype(jnp.float32) - mean * scale

    # BN affine + LeakyReLU are monotone in y (increasing for scale>=0,
    # decreasing for scale<0), so max over neighbors commutes with them.
    y_max = y_max_f.reshape(M, O)
    y_min = y_min_f.reshape(M, O)
    y_sel = jnp.where(scale >= 0.0, y_max, y_min)                # (M, O)
    z = y_sel * scale + shift
    out = jnp.where(z > 0, z, negative_slope * z)                # LeakyReLU(0.2)
    return out.reshape(B, N, O).transpose(0, 2, 1)               # (B, O, N)


# ----------------------------------------------------------------------------
# Pure-JAX reference (same kNN indices) for a numerical sanity check.
# ----------------------------------------------------------------------------
def _reference(x, conv_weight, bn_gamma, bn_beta, *, k, eps=1e-5, slope=0.2):
    B, C, N = x.shape
    O = conv_weight.shape[0]
    x_t = jnp.transpose(x, (0, 2, 1)).astype(jnp.float32)
    idx = _knn_indices(x_t, k)
    nbr = jax.vmap(lambda pts, nn_idx: pts[nn_idx])(x_t, idx)        # (B,N,k,C)
    center = jnp.broadcast_to(x_t[:, :, None, :], (B, N, k, C))
    edge = jnp.concatenate([nbr - center, center], axis=-1)          # (B,N,k,2C)
    W = conv_weight.reshape(O, 2 * C).astype(jnp.float32)
    y = jnp.einsum("bnkc,oc->bnko", edge, W,
                   precision=jax.lax.Precision.HIGHEST)
    mean = jnp.mean(y, axis=(0, 1, 2))
    var = jnp.mean((y - mean) ** 2, axis=(0, 1, 2))
    y = (y - mean) / jnp.sqrt(var + eps) * bn_gamma + bn_beta
    y = jnp.where(y > 0, y, slope * y)
    y = jnp.max(y, axis=2)                                           # (B, N, O)
    return jnp.transpose(y, (0, 2, 1))                               # (B, O, N)


if __name__ == "__main__":
    B, C, N = 2, 4, 64          # batch, in_features, num_points
    K_NEIGHBORS = 8
    OUT = 32                    # out_features

    key = jax.random.PRNGKey(0)
    kx, kw = jax.random.split(key)
    x = jax.random.normal(kx, (B, C, N), dtype=jnp.float32)

    # Conv2d(2C, OUT, 1, bias=False) weight: (OUT, 2C, 1, 1); deterministic init.
    conv_weight = (jax.random.normal(kw, (OUT, 2 * C, 1, 1), dtype=jnp.float32)
                   * (2.0 / (2 * C)) ** 0.5)
    bn_gamma = jnp.ones((OUT,), jnp.float32)   # BatchNorm2d default init
    bn_beta = jnp.zeros((OUT,), jnp.float32)

    out = edge_convolution(x, conv_weight, bn_gamma, bn_beta, k=K_NEIGHBORS)
    out = jax.block_until_ready(out)
    assert out.shape == (B, OUT, N), out.shape

    ref = _reference(x, conv_weight, bn_gamma, bn_beta, k=K_NEIGHBORS)
    max_err = float(jnp.max(jnp.abs(out - ref)))
    assert jnp.allclose(out, ref, rtol=1e-3, atol=1e-3), max_err

    print("KERNEL_OK")
</pallas_src>

<mosaic_0001>
module attributes {stable_mosaic.version = 11 : i64} {
  func.func @_knn_scores_kernel(%arg0: i32, %arg1: i32, %arg2: memref<1x64x5xf32, #tpu.memory_space<vmem>>, %arg3: memref<1x5x64xf32, #tpu.memory_space<vmem>>, %arg4: memref<1x64x64xf32, #tpu.memory_space<vmem>>) attributes {dimension_semantics = [#tpu.dimension_semantics<parallel>, #tpu.dimension_semantics<parallel>], iteration_bounds = array<i64: 2, 1>, scalar_prefetch = 0 : i64, scratch_operands = 0 : i64, tpu.core_type = #tpu.core_type<tc>, window_params = [{transform_indices = @transform_0, window_bounds = array<i64: 1, 64, 5>}, {transform_indices = @transform_1, window_bounds = array<i64: 1, 5, 64>}, {transform_indices = @transform_2, window_bounds = array<i64: 1, 64, 64>}]} {
    %c0 = arith.constant 0 : index
    %c0_0 = arith.constant 0 : index
    %c0_1 = arith.constant 0 : index
    %0 = vector.load %arg2[%c0, %c0_0, %c0_1] : memref<1x64x5xf32, #tpu.memory_space<vmem>>, vector<1x64x5xf32>
    %1 = vector.shape_cast %0 : vector<1x64x5xf32> to vector<64x5xf32>
    %c0_2 = arith.constant 0 : index
    %c0_3 = arith.constant 0 : index
    %c0_4 = arith.constant 0 : index
    %2 = vector.load %arg3[%c0_2, %c0_3, %c0_4] : memref<1x5x64xf32, #tpu.memory_space<vmem>>, vector<1x5x64xf32>
    %3 = vector.shape_cast %2 : vector<1x5x64xf32> to vector<5x64xf32>
    %cst = arith.constant dense<0.000000e+00> : vector<64x64xf32>
    %4 = tpu.matmul %1, %3, %cst {dimension_numbers = #tpu.dot_dimension_numbers<[1], [0], [0], [1], [0, 0, 1, 1], [], []>} : vector<64x5xf32>, vector<5x64xf32>, vector<64x64xf32> -> vector<64x64xf32>
    %c0_5 = arith.constant 0 : index
    %c0_6 = arith.constant 0 : index
    %c0_7 = arith.constant 0 : index
    %5 = vector.load %arg4[%c0_5, %c0_6, %c0_7] : memref<1x64x64xf32, #tpu.memory_space<vmem>>, vector<1x64x64xf32>
    %6 = vector.shape_cast %5 : vector<1x64x64xf32> to vector<64x64xf32>
    %7 = vector.shape_cast %4 : vector<64x64xf32> to vector<1x64x64xf32>
    tpu.vector_store %arg4[%c0_5, %c0_6, %c0_7], %7 {strides = array<i32>} : memref<1x64x64xf32, #tpu.memory_space<vmem>>, vector<1x64x64xf32>,
    return
  }
  func.func @transform_0(%arg0: i32, %arg1: i32) -> (i32, i32, i32) {
    %c0_i32 = arith.constant 0 : i32
    %c0_i32_0 = arith.constant 0 : i32
    return %arg0, %arg1, %c0_i32 : i32, i32, i32
  }
  func.func @transform_1(%arg0: i32, %arg1: i32) -> (i32, i32, i32) {
    %c0_i32 = arith.constant 0 : i32
    %c0_i32_0 = arith.constant 0 : i32
    %c0_i32_1 = arith.constant 0 : i32
    return %arg0, %c0_i32, %c0_i32_0 : i32, i32, i32
  }
  func.func @transform_2(%arg0: i32, %arg1: i32) -> (i32, i32, i32) {
    %c0_i32 = arith.constant 0 : i32
    %c0_i32_0 = arith.constant 0 : i32
    return %arg0, %arg1, %c0_i32 : i32, i32, i32
  }
}

</mosaic_0001>

<llo_original>
// kernel: tpu_custom_call.1
$region0: #{tpu_custom_call.1}
  #allocation0 [shape = 'u32[]', space=smem, size = 0x4, offset = 0x4, fixed_abs, tag = 'smem constant byte address 0x4 - core index']
  #allocation1 [shape = 'u32[144,128]{1,0:T(1,128)}', space=vmem, size = 0x12000, scoped, tag = 'internal scratch']
  %s0 = inlined_call_operand.vmem [shape: f32[2,64,5], index: 0, kind: input, shape index: {}]
  %s1 = inlined_call_operand.vmem [shape: f32[2,5,64], index: 1, kind: input, shape index: {}]
  %s2 = inlined_call_operand.hbm [shape: f32[2,64,64], index: 2, kind: output, shape index: {}]
  %s3 = sld [smem:[#allocation0]]
  $region41: #{tpu_custom_call.1} parent=0
    _
  %s5 = ssub.s32 1, %s3
  %s6 = scalar_select 0, %s5, %s3
  $region1: #{tpu_custom_call.1} parent=0
    #allocation2 [shape = 'u8[65536]{0}', space=vmem, size = 0x10000, scoped, tag = 'output window, operand 0']
    #allocation3 [shape = 's32[2]{0}', space=sflag, size = 0x8, scoped, tag = 'scoped memory for tpu_custom_call.1']
    %7 = vsyncpa [#allocation3], 0
    %s8 = scalar_lea.sflag [#allocation3], 1
    %9 = vsyncpa %s8, 0
    loop: start=0, step=1, limit=4
    $region2: #{tpu_custom_call.1} parent=1 // loop_pre_header
      _
    $region3: #{tpu_custom_call.1} parent=1 // loop_header
      %s11 = sphi 0, %s15
      %p12 = scmp.ge.s32.totalorder %s11, 4
      %s18 = sphi 0, %s30
      %s19 = sphi 0, %s26
      %s20 = sphi 0, %s18
      %s21 = sphi 0, %s19
      %s22 = sphi 0, %s20
      %s23 = sphi 0, %s21
      %s35 = sphi 0, %s37
      %s38 = sphi 0, %s35
      %s39 = sphi 0, %s38
      %s55 = sphi 0, %s39
      %s61 = sphi 0, %s63
      %s64 = sphi 0, %s61
      %s65 = sphi 0, %s64
      %s81 = sphi 0, %s65
      %s89 = sphi 0, %s91
      %s92 = sphi 0, %s89
      %s93 = sphi 0, %s92
      %s109 = sphi 0, %s93
    $region4: #{tpu_custom_call.1} parent=1 // loop_header_branch
      %14 = sbr.rel (%p12) target = $region8
    $region5: #{tpu_custom_call.1} parent=1 // loop_body
      %s16 = ssub.s32 %s11, 1
      %s17 = ssub.s32 %s11, 2
      %s24 = sadd.s32 1, %s19
      %p25 = scmp.ge.s32.totalorder %s24, 1
      %s26 = scalar_select %p25, 0, %s24
      %s27 = sadd.s32 1, %s18
      %s28 = scalar_select %p25, %s27, %s18
      %p29 = scmp.ge.s32.totalorder %s28, 2
      %s30 = scalar_select %p29, 0, %s28
      %s31 = ssub.s32 %s18, %s30
      %s32 = ssub.s32 %s19, %s26
      %s33 = sor.u32 %s31, %s32
      %p34 = scmp.eq.s32.totalorder %s33, 0
      %s36 = sadd.s32 %s35, 1
      %s37 = scalar_select %p34, %s35, %s36
      %p40 = pneg %p34
      %p41 = scmp.eq.s32.totalorder %s11, 1
      %p42 = por %p40, %p41
      %p43 = scmp.ne.s32.totalorder %s35, %s38
      %p44 = scmp.eq.s32.totalorder %s11, 0
      %p45 = por %p43, %p44
      %p46 = scmp.ne.s32.totalorder %s35, %s38
      %p47 = scmp.eq.s32.totalorder %s16, 1
      %p48 = por %p46, %p47
      %p49 = scmp.ne.s32.totalorder %s38, %s39
      %p50 = scmp.eq.s32.totalorder %s16, 0
      %p51 = por %p49, %p50
      %p52 = scmp.ne.s32.totalorder %s38, %s39
      %p53 = scmp.eq.s32.totalorder %s17, 1
      %p54 = por %p52, %p53
      %p56 = scmp.ne.s32.totalorder %s39, %s55
      %p57 = scmp.eq.s32.totalorder %s17, 0
      %p58 = por %p56, %p57
      %s59 = ssub.s32 %s18, %s30
      %p60 = scmp.eq.s32.totalorder %s59, 0
      %s62 = sadd.s32 %s61, 1
      %s63 = scalar_select %p60, %s61, %s62
      %p66 = pneg %p60
      %p67 = scmp.eq.s32.totalorder %s11, 1
      %p68 = por %p66, %p67
      %p69 = scmp.ne.s32.totalorder %s61, %s64
      %p70 = scmp.eq.s32.totalorder %s11, 0
      %p71 = por %p69, %p70
      %p72 = scmp.ne.s32.totalorder %s61, %s64
      %p73 = scmp.eq.s32.totalorder %s16, 1
      %p74 = por %p72, %p73
      %p75 = scmp.ne.s32.totalorder %s64, %s65
      %p76 = scmp.eq.s32.totalorder %s16, 0
      %p77 = por %p75, %p76
      %p78 = scmp.ne.s32.totalorder %s64, %s65
      %p79 = scmp.eq.s32.totalorder %s17, 1
      %p80 = por %p78, %p79
      %p82 = scmp.ne.s32.totalorder %s65, %s81
      %p83 = scmp.eq.s32.totalorder %s17, 0
      %p84 = por %p82, %p83
      %s85 = ssub.s32 %s18, %s30
      %s86 = ssub.s32 %s19, %s26
      %s87 = sor.u32 %s85, %s86
      %p88 = scmp.eq.s32.totalorder %s87, 0
      %s90 = sadd.s32 %s89, 1
      %s91 = scalar_select %p88, %s89, %s90
      %p94 = pneg %p88
      %p95 = scmp.eq.s32.totalorder %s11, 1
      %p96 = por %p94, %p95
      %p97 = scmp.ne.s32.totalorder %s89, %s92
      %p98 = scmp.eq.s32.totalorder %s11, 0
      %p99 = por %p97, %p98
      %p100 = scmp.ne.s32.totalorder %s89, %s92
      %p101 = scmp.eq.s32.totalorder %s16, 1
      %p102 = por %p100, %p101
      %p103 = scmp.ne.s32.totalorder %s92, %s93
      %p104 = scmp.eq.s32.totalorder %s16, 0
      %p105 = por %p103, %p104
      %p106 = scmp.ne.s32.totalorder %s92, %s93
      %p107 = scmp.eq.s32.totalorder %s17, 1
      %p108 = por %p106, %p107
      %p110 = scmp.ne.s32.totalorder %s93, %s109
      %p111 = scmp.eq.s32.totalorder %s17, 0
      %p112 = por %p110, %p111
      %p113 = scmp.le.s32.totalorder 1, %s11
      %p114 = scmp.lt.s32.totalorder %s11, 3
      %p115 = pnand %p113, %p114
      %p116 = pneg %p115
      // Predicated region
      $region9: #{tpu_custom_call.1} parent=5 // pred_check
        _
      $region10: #{tpu_custom_call.1} parent=5 // pred_check_branch
        %118 = sbr.rel (%p115) target = $region12
      $region11: #{tpu_custom_call.1} parent=5 // pred_region
        %s119 = ssub.s32 %s11, 1
      $region12: #{tpu_custom_call.1} parent=5 // pred_fallthru
        _
      %p120 = scmp.lt.s32.totalorder %s11, 2
      // Predicated region
      $region13: #{tpu_custom_call.1} parent=5 // pred_check
        %p121 = pneg %p120
      $region14: #{tpu_custom_call.1} parent=5 // pred_check_branch
        %123 = sbr.rel (%p121) target = $region16
      $region15: #{tpu_custom_call.1} parent=5 // pred_region
        // Predicated region
        $region17: #{tpu_custom_call.1} parent=15 // pred_check
          %p124 = pneg %p45
        $region18: #{tpu_custom_call.1} parent=15 // pred_check_branch
          %126 = sbr.rel (%p124) target = $region20
        $region19: #{tpu_custom_call.1} parent=15 // pred_region
          %s127 = smul.u32 8, %s19
          %p128 = scmp.lt.s32.totalorder %s18, 1
          %s129 = scalar_select %p128, %s18, 1
          %p130 = scmp.lt.s32.totalorder %s127, 7
          %s131 = scalar_select %p130, %s127, 7
          %s132 = smul.addr %s129, 8
          %s133 = sadd.s32 %s131, %s132
          %s134 = smul.addr %s133, 8
          %s135 = scalar_lea.vmem %s0, %s134
          %s136 = smul.u32 8, %s19
        $region20: #{tpu_custom_call.1} parent=15 // pred_fallthru
          _
        // Predicated region
        $region21: #{tpu_custom_call.1} parent=15 // pred_check
          %p137 = pneg %p71
        $region22: #{tpu_custom_call.1} parent=15 // pred_check_branch
          %139 = sbr.rel (%p137) target = $region24
        $region23: #{tpu_custom_call.1} parent=15 // pred_region
          %p140 = scmp.lt.s32.totalorder %s18, 1
          %s141 = scalar_select %p140, %s18, 1
          %s142 = smul.addr %s141, 8
          %s143 = scalar_lea.vmem %s1, %s142
        $region24: #{tpu_custom_call.1} parent=15 // pred_fallthru
          _
      $region16: #{tpu_custom_call.1} parent=5 // pred_fallthru
        _
      %p144 = scmp.le.s32.totalorder 1, %s11
      %p145 = scmp.lt.s32.totalorder %s11, 3
      %p146 = pnand %p144, %p145
      %p147 = pneg %p146
      // Predicated region
      $region25: #{tpu_custom_call.1} parent=5 // pred_check
        _
      $region26: #{tpu_custom_call.1} parent=5 // pred_check_branch
        %149 = sbr.rel (%p146) target = $region28
      $region27: #{tpu_custom_call.1} parent=5 // pred_region
        %s150 = ssub.s32 %s11, 1
        %s151 = smul.u32 8, %s21
        %p152 = scmp.lt.s32.totalorder %s20, 1
        %s153 = scalar_select %p152, %s20, 1
        %p154 = scmp.lt.s32.totalorder %s151, 7
        %s155 = scalar_select %p154, %s151, 7
        %s156 = smul.addr %s153, 8
        %s157 = sadd.s32 %s155, %s156
        %s158 = smul.addr %s157, 8
        %s159 = scalar_lea.vmem %s0, %s158
        %p160 = pneg %p51
        %p161 = pneg %p48
        %p162 = scmp.lt.s32.totalorder %s20, 1
        %s163 = scalar_select %p162, %s20, 1
        %s164 = smul.addr %s163, 8
        %s165 = scalar_lea.vmem %s1, %s164
        %p166 = pneg %p77
        %p167 = pneg %p74
        %p168 = pneg %p105
        %p169 = pneg %p102
        %s170 = sand.u32 %s92, 1
        %s171 = scalar_lea.sflag [#allocation3], %s170
        %s172 = sand.u32 %s92, 1
        %s173 = smul.addr %s172, 64
        %s174 = scalar_lea.vmem [#allocation2], %s173
        %s175 = smul.u32 8, %s21
        %p176 = scmp.lt.s32.totalorder %s20, 1
        %s177 = scalar_select %p176, %s20, 1
        %p178 = scmp.lt.s32.totalorder %s175, 7
        %s179 = scalar_select %p178, %s175, 7
        %s180 = smul.addr %s177, 8
        %s181 = sadd.s32 %s179, %s180
        %s182 = smul.addr %s181, 8
        %s183 = scalar_lea.vmem %s0, %s182
        %s184 = smul.u32 8, %s21
        %p185 = scmp.lt.s32.totalorder %s20, 1
        %s186 = scalar_select %p185, %s20, 1
        %s187 = smul.addr %s186, 8
        %s188 = scalar_lea.vmem %s1, %s187
        %s189 = smul.u32 8, %s21
        %v190 = vld [vmem:[%s183] sm:$0xff]
        %v191 = vld [vmem:[%s183 + $0x8] sm:$0xff]
        %v192 = vld [vmem:[%s183 + $0x10] sm:$0xff]
        %v193 = vld [vmem:[%s183 + $0x18] sm:$0xff]
        %v194 = vld [vmem:[%s183 + $0x20] sm:$0xff]
        %v195 = vld [vmem:[%s183 + $0x28] sm:$0xff]
        %v196 = vld [vmem:[%s183 + $0x30] sm:$0xff]
        %v197 = vld [vmem:[%s183 + $0x38] sm:$0xff]
        %v198 = vld [vmem:[%s188] sm:$0x1f]
        %vm199 = vcmask 39936
        %v201 = vsel %vm199, %v190, 0
        %v204 = vsel %vm199, %v191, 0
        %v207 = vsel %vm199, %v192, 0
        %v210 = vsel %vm199, %v193, 0
        %v213 = vsel %vm199, %v194, 0
        %v216 = vsel %vm199, %v195, 0
        %v219 = vsel %vm199, %v196, 0
        %v222 = vsel %vm199, %v197, 0
        %vm224 = vcmask 1044480
        %v226 = vsel %vm224, %v198, 0
        %228 = vmatprep.subr.mxu0 0.0
        %229 = vmatpush1.msra.mxu0 0.0
        %230 = vmatprep.subr.mxu0 0.0
        %231 = vmatpush1.msra.mxu0 0.0
        %232 = vmatprep.subr.mxu0 0.0
        %233 = vmatpush1.msra.mxu0 0.0
        %234 = vmatprep.subr.mxu0 0.0
        %235 = vmatpush1.msra.mxu0 0.0
        %236 = vmatprep.subr.mxu0 0.0
        %237 = vmatpush1.msra.mxu0 0.0
        %238 = vmatprep.subr.mxu0 0.0
        %239 = vmatpush1.msra.mxu0 0.0
        %240 = vmatprep.subr.mxu0 0.0
        %241 = vmatpush1.msra.mxu0 0.0
        %242 = vmatprep.subr.mxu0 0.0
        %243 = vmatpush1.msra.mxu0 0.0
        %244 = vmatprep.subr.mxu0 0.0
        %245 = vmatpush1.msra.mxu0 0.0
        %246 = vmatprep.subr.mxu0 0.0
        %247 = vmatpush1.msra.mxu0 0.0
        %248 = vmatprep.subr.mxu0 0.0
        %249 = vmatpush1.msra.mxu0 0.0
        %250 = vmatprep.subr.mxu0 0.0
        %251 = vmatpush1.msra.mxu0 0.0
        %252 = vmatprep.subr.mxu0 0.0
        %253 = vmatpush1.msra.mxu0 0.0
        %254 = vmatprep.subr.mxu0 0.0
        %255 = vmatpush1.msra.mxu0 0.0
        %256 = vmatprep.subr.mxu0 0.0
        %257 = vmatpush1.msra.mxu0 0.0
        %258 = vmatprep.subr.mxu0 0.0
        %259 = vmatpush1.msra.mxu0 %v226
        %260 = vmatprep.subr.mxu0 0.0
        %261 = vmatpush2.msra.mxu0 0.0
        %262 = vmatprep.subr.mxu0 0.0
        %263 = vmatpush2.msra.mxu0 0.0
        %264 = vmatprep.subr.mxu0 0.0
        %265 = vmatpush2.msra.mxu0 0.0
        %266 = vmatprep.subr.mxu0 0.0
        %267 = vmatpush2.msra.mxu0 0.0
        %268 = vmatprep.subr.mxu0 0.0
        %269 = vmatpush2.msra.mxu0 0.0
        %270 = vmatprep.subr.mxu0 0.0
        %271 = vmatpush2.msra.mxu0 0.0
        %272 = vmatprep.subr.mxu0 0.0
        %273 = vmatpush2.msra.mxu0 0.0
        %274 = vmatprep.subr.mxu0 0.0
        %275 = vmatpush2.msra.mxu0 0.0
        %276 = vmatprep.subr.mxu0 0.0
        %277 = vmatpush2.msra.mxu0 0.0
        %278 = vmatprep.subr.mxu0 0.0
        %279 = vmatpush2.msra.mxu0 0.0
        %280 = vmatprep.subr.mxu0 0.0
        %281 = vmatpush2.msra.mxu0 0.0
        %282 = vmatprep.subr.mxu0 0.0
        %283 = vmatpush2.msra.mxu0 0.0
        %284 = vmatprep.subr.mxu0 0.0
        %285 = vmatpush2.msra.mxu0 0.0
        %286 = vmatprep.subr.mxu0 0.0
        %287 = vmatpush2.msra.mxu0 0.0
        %288 = vmatprep.subr.mxu0 0.0
        %289 = vmatpush2.msra.mxu0 0.0
        %290 = vmatprep.subr.mxu0 0.0
        %291 = vmatpush2.msra.mxu0 0.0
        %292 = vmatprep.mubr.f32.mxu0 0.0
        %293 = vmatmul.mubr.f32.gmra.mxu0 %v201
        %v294 = vpop.f32.mrf.mxu0
        %v295 = vadd.f32 0.0, %v294
        %v296 = vpop.f32.mrf.mxu0
        %297 = vmatprep.mubr.f32.mxu0 0.0
        %298 = vmatmul.mubr.f32.gmra.mxu0 %v204
        %v299 = vpop.f32.mrf.mxu0
        %v300 = vadd.f32 0.0, %v299
        %v301 = vpop.f32.mrf.mxu0
        %302 = vmatprep.mubr.f32.mxu0 0.0
        %303 = vmatmul.mubr.f32.gmra.mxu0 %v207
        %v304 = vpop.f32.mrf.mxu0
        %v305 = vadd.f32 0.0, %v304
        %v306 = vpop.f32.mrf.mxu0
        %307 = vmatprep.mubr.f32.mxu0 0.0
        %308 = vmatmul.mubr.f32.gmra.mxu0 %v210
        %v309 = vpop.f32.mrf.mxu0
        %v310 = vadd.f32 0.0, %v309
        %v311 = vpop.f32.mrf.mxu0
        %312 = vmatprep.mubr.f32.mxu0 0.0
        %313 = vmatmul.mubr.f32.gmra.mxu0 %v213
        %v314 = vpop.f32.mrf.mxu0
        %v315 = vadd.f32 0.0, %v314
        %v316 = vpop.f32.mrf.mxu0
        %317 = vmatprep.mubr.f32.mxu0 0.0
        %318 = vmatmul.mubr.f32.gmra.mxu0 %v216
        %v319 = vpop.f32.mrf.mxu0
        %v320 = vadd.f32 0.0, %v319
        %v321 = vpop.f32.mrf.mxu0
        %322 = vmatprep.mubr.f32.mxu0 0.0
        %323 = vmatmul.mubr.f32.gmra.mxu0 %v219
        %v324 = vpop.f32.mrf.mxu0
        %v325 = vadd.f32 0.0, %v324
        %v326 = vpop.f32.mrf.mxu0
        %327 = vmatprep.mubr.f32.mxu0 0.0
        %328 = vmatmul.mubr.f32.gmra.mxu0 %v222
        %v329 = vpop.f32.mrf.mxu0
        %v330 = vadd.f32 0.0, %v329
        %v331 = vpop.f32.mrf.mxu0
        %332 = vdwg.mxu0
        %vm333 = vcmask 523264
        %334 = vst.msk [vmem:[%s174] sm:$0xff] %vm333, %v295
        %335 = vst.msk [vmem:[%s174 + $0x8] sm:$0xff] %vm333, %v300
        %336 = vst.msk [vmem:[%s174 + $0x10] sm:$0xff] %vm333, %v305
        %337 = vst.msk [vmem:[%s174 + $0x18] sm:$0xff] %vm333, %v310
        %338 = vst.msk [vmem:[%s174 + $0x20] sm:$0xff] %vm333, %v315
        %339 = vst.msk [vmem:[%s174 + $0x28] sm:$0xff] %vm333, %v320
        %340 = vst.msk [vmem:[%s174 + $0x30] sm:$0xff] %vm333, %v325
        %341 = vst.msk [vmem:[%s174 + $0x38] sm:$0xff] %vm333, %v330
        %s342 = sand.u32 %s92, 1
        %s343 = scalar_lea.sflag [#allocation3], %s342
        %s344 = sand.u32 %s92, 1
        %s345 = smul.addr %s344, 64
        %s346 = scalar_lea.vmem [#allocation2], %s345
        // Predicated region
        $region29: #{tpu_custom_call.1} parent=27 // pred_check
          %p347 = pneg %p102
        $region30: #{tpu_custom_call.1} parent=27 // pred_check_branch
          %349 = sbr.rel (%p347) target = $region32
        $region31: #{tpu_custom_call.1} parent=27 // pred_region
          %s350 = smul.u32 8, %s21
          %s352 = ssub.s32 1024, 1024
          %353 = vsyncadd %s343, %s352
          %s354 = smul.addr %s20, 8
          %s355 = sadd.s32 %s350, %s354
          %s356 = smul.addr %s355, 128
          %s357 = scalar_lea.hbm %s2, %s356
          %s358 = sshll.u32 %s346, 4
          %s359 = int_to_ptr.vmem [resolvable:$true] %s358
          %364 = dma.vmem_to_hbm [thread:$0]  %s359, 1024, %s357, %s343, 128, 128, 8
        $region32: #{tpu_custom_call.1} parent=27 // pred_fallthru
          _
      $region28: #{tpu_custom_call.1} parent=5 // pred_fallthru
        _
      %p365 = scmp.le.s32.totalorder 2, %s11
      // Predicated region
      $region33: #{tpu_custom_call.1} parent=5 // pred_check
        %p366 = pneg %p365
      $region34: #{tpu_custom_call.1} parent=5 // pred_check_branch
        %368 = sbr.rel (%p366) target = $region36
      $region35: #{tpu_custom_call.1} parent=5 // pred_region
        %s369 = ssub.s32 %s11, 2
        // Predicated region
        $region37: #{tpu_custom_call.1} parent=35 // pred_check
          %p370 = pneg %p108
        $region38: #{tpu_custom_call.1} parent=35 // pred_check_branch
          %372 = sbr.rel (%p370) target = $region40
        $region39: #{tpu_custom_call.1} parent=35 // pred_region
          %s373 = sand.u32 %s93, 1
          %s374 = scalar_lea.sflag [#allocation3], %s373
          %s375 = sand.u32 %s93, 1
          %s376 = smul.addr %s375, 64
          %s377 = scalar_lea.vmem [#allocation2], %s376
          %378 = dma.done %s374, 1024
        $region40: #{tpu_custom_call.1} parent=35 // pred_fallthru
          _
      $region36: #{tpu_custom_call.1} parent=5 // pred_fallthru
        _
    $region6: #{tpu_custom_call.1} parent=1 // loop_footer
      %s15 = sadd.s32 1, %s11
    $region7: #{tpu_custom_call.1} parent=1 // loop_footer_branch
      %10 = sbr.rel target = $region3
    $region8: #{tpu_custom_call.1} parent=1 // loop_exit
      _
    %379 = vsyncpa [#allocation3], 1
    %s380 = scalar_lea.sflag [#allocation3], 1
    %381 = vsyncpa %s380, 1

</llo_original>
